<compile_context>
chip_gen: v7x
topology: tpu7x:2x2x1
jax: 0.10.0
libtpu: 0.0.40
codegen_flags: <defaults>
</compile_context>

<pallas_src>
import functools

import jax
import jax.numpy as jnp
from jax.experimental import pallas as pl
from jax.experimental.pallas import tpu as pltpu


def _layernorm_kernel(x_ref, w_ref, b_ref, o_ref, *, eps, inv_hidden):
    # x_ref: (row_tile, hidden) block in VMEM; normalize over the last axis.
    x = x_ref[...].astype(jnp.float32)
    # Single-pass statistics: sum(x) and sum(x*x) reduced together; variance
    # derived as E[x^2] - mean^2 (clamped at 0 against f32 cancellation).
    u = jnp.sum(x, axis=-1, keepdims=True) * inv_hidden
    ex2 = jnp.sum(x * x, axis=-1, keepdims=True) * inv_hidden
    s = jnp.maximum(ex2 - u * u, 0.0)
    inv = jax.lax.rsqrt(s + eps)
    # weight/bias were pre-cast to f32 in the wrapper (same (0,0) block is
    # reused every grid step, so no per-step cast / extra VPU work here).
    o_ref[...] = (w_ref[...] * ((x - u) * inv) + b_ref[...]).astype(o_ref.dtype)


def _vmem_capacity_bytes():
    """Per-core VMEM capacity; conservative (v7x-class 64 MiB) fallback."""
    try:
        return int(pltpu.get_tpu_info().vmem_capacity_bytes)
    except Exception:
        return 64 * 1024 * 1024


def _round_up(x, m):
    return ((x + m - 1) // m) * m


def _pick_row_tile(rows, hidden, in_bytes, out_bytes, vmem_cap):
    """Largest row tile (multiple of 8) whose double-buffered blocks plus
    in-kernel f32 temporaries fit a generation-aware VMEM block budget, while
    keeping >= 4 grid steps (>= 2 per TensorCore) when the row count allows."""
    if vmem_cap <= 80 * 1024 * 1024:      # v7x: 64 MiB per TensorCore
        block_budget = 24 * 1024 * 1024
    else:                                  # v5e / v6e: 128 MiB
        block_budget = 64 * 1024 * 1024

    # Per-row cost: 2x double-buffered input + 2x double-buffered output
    # blocks, plus ~3 full-tile f32 temporaries (upcast x, x*x, pre-cast out).
    per_row = 2 * hidden * (in_bytes + out_bytes) + 12 * hidden
    tile = block_budget // max(per_row, 1)
    tile = max(8, (tile // 8) * 8)         # byte-capped; no fixed row cap

    rows8 = _round_up(rows, 8)
    tile = min(tile, rows8)

    # Keep >= 4 grid steps so fetch(i+1) overlaps compute(i) and megacore can
    # split the "parallel" grid axis across both TensorCores on v7x.
    min_steps = 4
    if rows8 > min_steps * 8 and pl.cdiv(rows, tile) < min_steps:
        tile = max(8, (pl.cdiv(rows, min_steps) // 8) * 8)
    return tile


def layer_norm(x, weight, bias, eps=1e-12, row_tile=None):
    """TF-style LayerNorm over the last axis of x (eps inside the sqrt)."""
    orig_shape = x.shape
    hidden = orig_shape[-1]
    rows = 1
    for d in orig_shape[:-1]:
        rows *= d

    x2d = x.reshape(rows, hidden)
    # Cast params to f32 once in the wrapper instead of every grid step.
    w2d = weight.astype(jnp.float32).reshape(1, hidden)
    b2d = bias.astype(jnp.float32).reshape(1, hidden)

    in_bytes = x.dtype.itemsize
    out_bytes = x.dtype.itemsize
    vmem_cap = _vmem_capacity_bytes()
    if row_tile is None:
        row_tile = _pick_row_tile(rows, hidden, in_bytes, out_bytes, vmem_cap)

    grid = (pl.cdiv(rows, row_tile),)  # ragged last block: OOB writes masked

    # Scoped VMEM: double-buffered in/out blocks, ~3 full-tile f32 temporaries,
    # weight/bias blocks, plus headroom. Cap by generation (v7x has 64 MiB).
    block_bytes = (2 * row_tile * hidden * (in_bytes + out_bytes)
                   + 3 * row_tile * hidden * 4)
    param_bytes = 2 * 2 * hidden * 4
    limit_cap = (56 << 20) if vmem_cap <= (80 << 20) else (100 << 20)
    vmem_limit = int(min(block_bytes + param_bytes + (8 << 20), limit_cap))

    # TODO(synk): hidden < 128 leaves output lanes partially masked (vst.msk);
    # a lane-dense repack would recover store bandwidth for tiny hidden sizes.
    out = pl.pallas_call(
        functools.partial(_layernorm_kernel, eps=eps, inv_hidden=1.0 / hidden),
        out_shape=jax.ShapeDtypeStruct((rows, hidden), x.dtype),
        grid_spec=pltpu.PrefetchScalarGridSpec(
            num_scalar_prefetch=0,
            grid=grid,
            in_specs=[
                pl.BlockSpec((row_tile, hidden), lambda i: (i, 0)),
                pl.BlockSpec((1, hidden), lambda i: (0, 0)),
                pl.BlockSpec((1, hidden), lambda i: (0, 0)),
            ],
            out_specs=pl.BlockSpec((row_tile, hidden), lambda i: (i, 0)),
        ),
        compiler_params=pltpu.CompilerParams(
            dimension_semantics=("parallel",),
            vmem_limit_bytes=vmem_limit,
        ),
    )(x2d, w2d, b2d)

    return out.reshape(orig_shape)


if __name__ == "__main__":
    batch, seq, hidden = 2, 8, 32
    key = jax.random.PRNGKey(0)
    x = jax.random.normal(key, (batch, seq, hidden), dtype=jnp.float32)

    # Parameters matching nn.Parameter(torch.ones/zeros(hidden_size)).
    weight = jnp.ones((hidden,), dtype=jnp.float32)
    bias = jnp.zeros((hidden,), dtype=jnp.float32)

    y = layer_norm(x, weight, bias, eps=1e-12)
    y = jax.block_until_ready(y)

    # Pure-JAX reference check (same TF-style formula as the PyTorch module).
    u = jnp.mean(x, axis=-1, keepdims=True)
    s = jnp.mean((x - u) ** 2, axis=-1, keepdims=True)
    ref = weight * ((x - u) / jnp.sqrt(s + 1e-12)) + bias
    assert jnp.allclose(y, ref, atol=1e-5, rtol=1e-5), "mismatch vs reference"

    print("KERNEL_OK")
</pallas_src>

<mosaic_0001>
module attributes {stable_mosaic.version = 11 : i64} {
  func.func @_layernorm_kernel(%arg0: i32, %arg1: memref<16x32xf32, #tpu.memory_space<vmem>>, %arg2: memref<1x32xf32, #tpu.memory_space<vmem>>, %arg3: memref<1x32xf32, #tpu.memory_space<vmem>>, %arg4: memref<16x32xf32, #tpu.memory_space<vmem>>) attributes {dimension_semantics = [#tpu.dimension_semantics<parallel>], iteration_bounds = array<i64: 1>, scalar_prefetch = 0 : i64, scratch_operands = 0 : i64, tpu.core_type = #tpu.core_type<tc>, window_params = [{transform_indices = @transform_0, window_bounds = array<i64: 16, 32>}, {pipeline_mode = #tpu.pipeline_mode<synchronous>, transform_indices = @transform_1, window_bounds = array<i64: 1, 32>}, {pipeline_mode = #tpu.pipeline_mode<synchronous>, transform_indices = @transform_2, window_bounds = array<i64: 1, 32>}, {transform_indices = @transform_3, window_bounds = array<i64: 16, 32>}]} {
    %c0 = arith.constant 0 : index
    %c0_0 = arith.constant 0 : index
    %0 = vector.load %arg1[%c0, %c0_0] : memref<16x32xf32, #tpu.memory_space<vmem>>, vector<16x32xf32>
    %cst = arith.constant dense<0.000000e+00> : vector<16xf32>
    %1 = vector.multi_reduction <add>, %0, %cst [1] : vector<16x32xf32> to vector<16xf32>
    %2 = vector.shape_cast %1 : vector<16xf32> to vector<16x1xf32>
    %cst_1 = arith.constant 3.125000e-02 : f32
    %3 = vector.broadcast %cst_1 : f32 to vector<16x1xf32>
    %4 = arith.mulf %2, %3 : vector<16x1xf32>
    %5 = arith.mulf %0, %0 : vector<16x32xf32>
    %cst_2 = arith.constant dense<0.000000e+00> : vector<16xf32>
    %6 = vector.multi_reduction <add>, %5, %cst_2 [1] : vector<16x32xf32> to vector<16xf32>
    %7 = vector.shape_cast %6 : vector<16xf32> to vector<16x1xf32>
    %cst_3 = arith.constant 3.125000e-02 : f32
    %8 = vector.broadcast %cst_3 : f32 to vector<16x1xf32>
    %9 = arith.mulf %7, %8 : vector<16x1xf32>
    %10 = arith.mulf %4, %4 : vector<16x1xf32>
    %11 = arith.subf %9, %10 : vector<16x1xf32>
    %cst_4 = arith.constant 0.000000e+00 : f32
    %12 = vector.broadcast %cst_4 : f32 to vector<16x1xf32>
    %13 = arith.maximumf %11, %12 : vector<16x1xf32>
    %cst_5 = arith.constant 9.99999996E-13 : f32
    %14 = vector.broadcast %cst_5 : f32 to vector<16x1xf32>
    %15 = arith.addf %13, %14 : vector<16x1xf32>
    %16 = math.rsqrt %15 : vector<16x1xf32>
    %c0_6 = arith.constant 0 : index
    %c0_7 = arith.constant 0 : index
    %17 = vector.load %arg2[%c0_6, %c0_7] : memref<1x32xf32, #tpu.memory_space<vmem>>, vector<1x32xf32>
    %18 = vector.broadcast %4 : vector<16x1xf32> to vector<16x32xf32>
    %19 = arith.subf %0, %18 : vector<16x32xf32>
    %20 = vector.broadcast %16 : vector<16x1xf32> to vector<16x32xf32>
    %21 = arith.mulf %19, %20 : vector<16x32xf32>
    %22 = vector.broadcast %17 : vector<1x32xf32> to vector<16x32xf32>
    %23 = arith.mulf %22, %21 : vector<16x32xf32>
    %c0_8 = arith.constant 0 : index
    %c0_9 = arith.constant 0 : index
    %24 = vector.load %arg3[%c0_8, %c0_9] : memref<1x32xf32, #tpu.memory_space<vmem>>, vector<1x32xf32>
    %25 = vector.broadcast %24 : vector<1x32xf32> to vector<16x32xf32>
    %26 = arith.addf %23, %25 : vector<16x32xf32>
    %c0_10 = arith.constant 0 : index
    %c0_11 = arith.constant 0 : index
    %27 = vector.load %arg4[%c0_10, %c0_11] : memref<16x32xf32, #tpu.memory_space<vmem>>, vector<16x32xf32>
    tpu.vector_store %arg4[%c0_10, %c0_11], %26 {strides = array<i32>} : memref<16x32xf32, #tpu.memory_space<vmem>>, vector<16x32xf32>,
    return
  }
  func.func @transform_0(%arg0: i32) -> (i32, i32) {
    %c0_i32 = arith.constant 0 : i32
    %c0_i32_0 = arith.constant 0 : i32
    return %arg0, %c0_i32 : i32, i32
  }
  func.func @transform_1(%arg0: i32) -> (i32, i32) {
    %c0_i32 = arith.constant 0 : i32
    %c0_i32_0 = arith.constant 0 : i32
    %c0_i32_1 = arith.constant 0 : i32
    return %c0_i32, %c0_i32_0 : i32, i32
  }
  func.func @transform_2(%arg0: i32) -> (i32, i32) {
    %c0_i32 = arith.constant 0 : i32
    %c0_i32_0 = arith.constant 0 : i32
    %c0_i32_1 = arith.constant 0 : i32
    return %c0_i32, %c0_i32_0 : i32, i32
  }
  func.func @transform_3(%arg0: i32) -> (i32, i32) {
    %c0_i32 = arith.constant 0 : i32
    %c0_i32_0 = arith.constant 0 : i32
    return %arg0, %c0_i32 : i32, i32
  }
}

</mosaic_0001>

<llo_original>
// kernel: tpu_custom_call.1
$region0: #{tpu_custom_call.1}
  #allocation0 [shape = 'u32[]', space=smem, size = 0x4, offset = 0x4, fixed_abs, tag = 'smem constant byte address 0x4 - core index']
  #allocation1 [shape = 'u32[144,128]{1,0:T(1,128)}', space=vmem, size = 0x12000, scoped, tag = 'internal scratch']
  %s0 = inlined_call_operand.hbm [shape: f32[16,32], index: 0, kind: input, shape index: {}]
  %s1 = inlined_call_operand.vmem [shape: f32[1,32], index: 1, kind: input, shape index: {}]
  %s2 = inlined_call_operand.vmem [shape: f32[1,32], index: 2, kind: input, shape index: {}]
  %s3 = inlined_call_operand.hbm [shape: f32[16,32], index: 3, kind: output, shape index: {}]
  %s4 = sld [smem:[#allocation0]]
  $region26: #{tpu_custom_call.1} parent=0
    _
  %s6 = ssub.s32 1, %s4
  %s7 = scalar_select 0, %s6, %s4
  $region1: #{tpu_custom_call.1} parent=0
    #allocation2 [shape = 'u8[8192]{0}', space=vmem, size = 0x2000, scoped, tag = 'input window, operand 0, single buffered']
    #allocation3 [shape = 's32[1]{0}', space=sflag, size = 0x4, scoped, tag = 'scoped memory for tpu_custom_call.1']
    #allocation4 [shape = 's32[1]{0}', space=sflag, size = 0x4, scoped, tag = 'scoped memory for tpu_custom_call.1']
    #allocation5 [shape = 'u8[8192]{0}', space=vmem, size = 0x2000, scoped, tag = 'output window, operand 0, single buffered']
    %8 = vsyncpa [#allocation3], 0
    %9 = vsyncpa [#allocation4], 0
    // Predicated region
    $region2: #{tpu_custom_call.1} parent=1 // pred_check
      _
    $region3: #{tpu_custom_call.1} parent=1 // pred_check_branch
      %11 = sbr.rel (0) target = $region5
    $region4: #{tpu_custom_call.1} parent=1 // pred_region
      %s13 = ssub.s32 256, 256
      %14 = vsyncadd [#allocation3], %s13
      %s15 = sshll.u32 [#allocation2], 4
      %s16 = int_to_ptr.vmem [resolvable:$true] %s15
      %21 = dma.hbm_to_vmem [thread:$0]  %s0, 256, %s16, [#allocation3], 128, 128, 8
    $region5: #{tpu_custom_call.1} parent=1 // pred_fallthru
      _
    // Predicated region
    $region6: #{tpu_custom_call.1} parent=1 // pred_check
      _
    $region7: #{tpu_custom_call.1} parent=1 // pred_check_branch
      %23 = sbr.rel (0) target = $region9
    $region8: #{tpu_custom_call.1} parent=1 // pred_region
      _
    $region9: #{tpu_custom_call.1} parent=1 // pred_fallthru
      _
    // Predicated region
    $region10: #{tpu_custom_call.1} parent=1 // pred_check
      _
    $region11: #{tpu_custom_call.1} parent=1 // pred_check_branch
      %25 = sbr.rel (0) target = $region13
    $region12: #{tpu_custom_call.1} parent=1 // pred_region
      _
    $region13: #{tpu_custom_call.1} parent=1 // pred_fallthru
      _
    // Predicated region
    $region14: #{tpu_custom_call.1} parent=1 // pred_check
      _
    $region15: #{tpu_custom_call.1} parent=1 // pred_check_branch
      %27 = sbr.rel (0) target = $region17
    $region16: #{tpu_custom_call.1} parent=1 // pred_region
      %28 = dma.done [#allocation3], 256
    $region17: #{tpu_custom_call.1} parent=1 // pred_fallthru
      _
    %v29 = vld [vmem:[#allocation2] sm:$0xff]
    %v30 = vld [vmem:[#allocation2 + $0x8] sm:$0xff]
    %vm31 = vcmask 261120
    %v32 = vsel %vm31, %v29, 0.0
    %33 = vadd.xlane.f32.xlu0 %v32
    %v34 = vpop.xlane.xlu0 %33
    %v35 = vsel %vm31, %v30, 0.0
    %36 = vadd.xlane.f32.xlu0 %v35
    %v37 = vpop.xlane.xlu0 %36
    %v38 = vmul.f32 %v34, 0.03125
    %v39 = vmul.f32 %v37, 0.03125
    %v40 = vmul.f32 %v29, %v29
    %v41 = vmul.f32 %v30, %v30
    %v42 = vsel %vm31, %v40, 0.0
    %43 = vadd.xlane.f32.xlu0 %v42
    %v44 = vpop.xlane.xlu0 %43
    %v45 = vsel %vm31, %v41, 0.0
    %46 = vadd.xlane.f32.xlu0 %v45
    %v47 = vpop.xlane.xlu0 %46
    %v48 = vmul.f32 %v44, 0.03125
    %v49 = vmul.f32 %v47, 0.03125
    %v50 = vmul.f32 %v38, %v38
    %v51 = vmul.f32 %v39, %v39
    %v52 = vsub.f32 %v48, %v50
    %v53 = vsub.f32 %v49, %v51
    %v54 = vmax.f32 %v52, 0.0
    %v55 = vmax.f32 %v53, 0.0
    %v56 = vadd.f32 %v54, 1e-12
    %v57 = vadd.f32 %v55, 1e-12
    %v58 = vrsqrt.pop %v56
    %v59 = vrsqrt.pop %v57
    %v60 = vld [vmem:[%s1] sm:$0x1]
    %v61 = vsub.f32 %v29, %v38
    %v62 = vsub.f32 %v30, %v39
    %v63 = vmul.f32 %v61, %v58
    %v64 = vmul.f32 %v62, %v59
    %v66 = vlaneseq
    %v67 = vshrl.u32 %v66, 7
    %v68 = vsub.s32 0, %v67
    %v69 = vrot.slane %v60, %v68
    %v71 = vmul.f32 %v69, %v63
    %v72 = vmul.f32 %v69, %v64
    %v73 = vld [vmem:[%s2] sm:$0x1]
    %v75 = vlaneseq
    %v76 = vshrl.u32 %v75, 7
    %v77 = vsub.s32 0, %v76
    %v78 = vrot.slane %v73, %v77
    %v80 = vadd.f32 %v71, %v78
    %v81 = vadd.f32 %v72, %v78
    %82 = vst.msk [vmem:[#allocation5] sm:$0xff] %vm31, %v80
    %83 = vst.msk [vmem:[#allocation5 + $0x8] sm:$0xff] %vm31, %v81
    // Predicated region
    $region18: #{tpu_custom_call.1} parent=1 // pred_check
      _
    $region19: #{tpu_custom_call.1} parent=1 // pred_check_branch
      %85 = sbr.rel (0) target = $region21
    $region20: #{tpu_custom_call.1} parent=1 // pred_region
      %s87 = ssub.s32 256, 256
      %88 = vsyncadd [#allocation4], %s87
      %s89 = sshll.u32 [#allocation5], 4
      %s90 = int_to_ptr.vmem [resolvable:$true] %s89
      %95 = dma.vmem_to_hbm [thread:$0]  %s90, 256, %s3, [#allocation4], 128, 128, 8
    $region21: #{tpu_custom_call.1} parent=1 // pred_fallthru
      _
    // Predicated region
    $region22: #{tpu_custom_call.1} parent=1 // pred_check
      _
    $region23: #{tpu_custom_call.1} parent=1 // pred_check_branch
      %97 = sbr.rel (0) target = $region25
    $region24: #{tpu_custom_call.1} parent=1 // pred_region
      %98 = dma.done [#allocation4], 256
    $region25: #{tpu_custom_call.1} parent=1 // pred_fallthru
      _
    %99 = vsyncpa [#allocation3], 1
    %100 = vsyncpa [#allocation4], 1

</llo_original>
